<compile_context>
chip_gen: v6e
topology: v6e:2x2x1
jax: 0.10.0
libtpu: 0.0.40
codegen_flags: <defaults>
</compile_context>

<pallas_src>
import jax
import jax.numpy as jnp
import numpy as np
from jax import lax
from jax.experimental import pallas as pl
from jax.experimental.pallas import tpu as pltpu

LANE = 128


def _rotvec_to_rotmat_kernel(v_ref, r_ref):
    """Rodrigues' formula over a dense (TILE_R, 128) slab of rotation vectors.

    v_ref: (3, TILE_R, 128)  component-major rotation vectors [vx; vy; vz]
    r_ref: (9, TILE_R, 128)  rotation-matrix entries [r00 r01 r02 r10 ... r22]
    """
    vx = v_ref[0].astype(jnp.float32)
    vy = v_ref[1].astype(jnp.float32)
    vz = v_ref[2].astype(jnp.float32)

    xx, yy, zz = vx * vx, vy * vy, vz * vz
    theta2 = xx + yy + zz
    small = theta2 < 1e-8
    safe_t2 = jnp.where(small, jnp.ones_like(theta2), theta2)

    # No sqrt / no divides: rsqrt on the EUP + multiplies on the VPU.
    inv_t = lax.rsqrt(safe_t2)                # 1/theta
    t = safe_t2 * inv_t                       # theta
    half = 0.5 * t
    sh = jnp.sin(half)
    ch = jnp.cos(half)
    sinc_h = (2.0 * inv_t) * sh               # sin(theta/2) / (theta/2)

    # a = sin(t)/t = sinc(t/2)*cos(t/2) ; b = (1-cos t)/t^2 = 0.5*sinc(t/2)^2
    # (well-conditioned, no (1-cos) cancellation). Taylor series near zero.
    a = jnp.where(small, 1.0 - theta2 * (1.0 / 6.0), sinc_h * ch)
    b = jnp.where(small, 0.5 - theta2 * (1.0 / 24.0), 0.5 * (sinc_h * sinc_h))

    xy, xz, yz = vx * vy, vx * vz, vy * vz
    avx, avy, avz = a * vx, a * vy, a * vz
    od = r_ref.dtype

    # Direct per-row stores -- plain vst's, no sublane concatenate.
    r_ref[0] = (1.0 - b * (yy + zz)).astype(od)
    r_ref[1] = (b * xy - avz).astype(od)
    r_ref[2] = (b * xz + avy).astype(od)
    r_ref[3] = (b * xy + avz).astype(od)
    r_ref[4] = (1.0 - b * (xx + zz)).astype(od)
    r_ref[5] = (b * yz - avx).astype(od)
    r_ref[6] = (b * xz - avy).astype(od)
    r_ref[7] = (b * yz + avx).astype(od)
    r_ref[8] = (1.0 - b * (xx + yy)).astype(od)


def _rotvec_to_rotmat_ref(rotvec):
    """Pure-jnp Rodrigues (reference for tests + small-N fallback)."""
    theta = jnp.linalg.norm(rotvec, axis=-1, keepdims=True)
    safe = jnp.where(theta < 1e-8, jnp.ones_like(theta), theta)
    k = rotvec / safe
    kx, ky, kz = k[..., 0], k[..., 1], k[..., 2]
    zero = jnp.zeros_like(kx)
    K = jnp.stack([
        jnp.stack([zero, -kz, ky], -1),
        jnp.stack([kz, zero, -kx], -1),
        jnp.stack([-ky, kx, zero], -1),
    ], -2)
    th = theta[..., None]
    I = jnp.eye(3, dtype=rotvec.dtype)
    R = I + jnp.sin(th) * K + (1.0 - jnp.cos(th)) * (K @ K)
    return jnp.where(th < 1e-8, jnp.broadcast_to(I, R.shape), R)


def rotvec_to_rotmat(rotvec, *, min_pallas_n=512):
    """Pallas-backed equivalent of roma.rotvec_to_rotmat.

    rotvec: (..., 3) float  ->  (..., 3, 3) float
    """
    lead_shape = rotvec.shape[:-1]
    n = int(np.prod(lead_shape)) if lead_shape else 1

    # Small-N fallback: pallas_call launch + pad/transpose glue would dominate.
    if n < min_pallas_n:
        return _rotvec_to_rotmat_ref(rotvec)

    flat = rotvec.reshape(n, 3).astype(jnp.float32)
    r_rows = pl.cdiv(n, LANE)
    # 1024 rotvecs / grid step for moderate N, 4096 for large N.
    tile_r = 8 if r_rows < 64 else 32
    r_pad = pl.cdiv(r_rows, tile_r) * tile_r
    npad = r_pad * LANE

    # Component-major 3-D slab (3, R, 128): lane- and sublane-dense.
    flat = jnp.pad(flat, ((0, npad - n), (0, 0)))   # padded rotvecs -> identity
    v = flat.T.reshape(3, r_pad, LANE)

    out = pl.pallas_call(
        _rotvec_to_rotmat_kernel,
        out_shape=jax.ShapeDtypeStruct((9, r_pad, LANE), jnp.float32),
        grid_spec=pltpu.PrefetchScalarGridSpec(
            num_scalar_prefetch=0,
            grid=(r_pad // tile_r,),
            in_specs=[pl.BlockSpec((3, tile_r, LANE), lambda i: (0, i, 0))],
            out_specs=pl.BlockSpec((9, tile_r, LANE), lambda i: (0, i, 0)),
        ),
        compiler_params=pltpu.CompilerParams(
            dimension_semantics=("parallel",)),
    )(v)

    # Single transpose back to element-major -- required because the module
    # must return rotmat as (..., 3, 3) row-major.
    r9 = out.reshape(9, npad)[:, :n]                # (9, N) component-major
    return r9.T.reshape(lead_shape + (3, 3)).astype(rotvec.dtype)


def six_dim(x):
    """Move to 6d rotation representation; return (x6d, rotvec, rotmat, trans)."""
    B, S, _ = x.shape
    x = x.reshape(B, S, -1, 3)
    trans = x[:, :, -1]                              # (B, S, 3)
    rotvec = x[:, :, :-1]                            # (B, S, J-1, 3)
    rotmat = rotvec_to_rotmat(rotvec)                # (B, S, J-1, 3, 3)
    rot6 = rotmat[..., :2].reshape(B, S, -1)         # == torch .flatten(2)
    x6 = jnp.concatenate([rot6, trans], axis=-1)
    return x6, rotvec, rotmat, trans


class SimplePreparator:
    def __init__(self, mask_trans, pred_trans, **kwargs):
        self.mask_trans = mask_trans
        self.pred_trans = pred_trans

    def __call__(self, x, **kwargs):
        x6, rotvec, rotmat, trans = six_dim(x)
        assert self.mask_trans == (not self.pred_trans), \
            'mask_trans and pred_trans incoherent'
        if self.mask_trans:
            trans = jnp.zeros_like(trans)
        # trivial slice + subtract glue (elementwise, kept in plain JAX)
        trans_delta = trans[:, 1:] - trans[:, :-1]
        return x6, rotvec, rotmat, trans, trans_delta, None


if __name__ == "__main__":
    key = jax.random.PRNGKey(0)

    # 24 rotation joints + 1 translation per frame => N = 2*16*24 = 768 rotvecs,
    # which is above the small-N threshold, so the Pallas path is exercised.
    B, S, J = 2, 16, 25
    x = jax.random.normal(key, (B, S, 3 * J), dtype=jnp.float32)

    model = SimplePreparator(mask_trans=False, pred_trans=True)
    x6, rotvec, rotmat, trans, trans_delta, aux = model(x)
    jax.block_until_ready((x6, rotvec, rotmat, trans, trans_delta))

    # shape checks (match PyTorch semantics)
    assert x6.shape == (B, S, (J - 1) * 6 + 3)
    assert rotvec.shape == (B, S, J - 1, 3)
    assert rotmat.shape == (B, S, J - 1, 3, 3)
    assert trans.shape == (B, S, 3)
    assert trans_delta.shape == (B, S - 1, 3)
    assert aux is None

    # numerics check vs pure-JAX Rodrigues reference (Pallas path)
    rotmat_ref = _rotvec_to_rotmat_ref(rotvec)
    np.testing.assert_allclose(np.asarray(rotmat), np.asarray(rotmat_ref),
                               rtol=1e-5, atol=1e-5)
    x6_ref = jnp.concatenate(
        [rotmat_ref[..., :2].reshape(B, S, -1), trans], axis=-1)
    np.testing.assert_allclose(np.asarray(x6), np.asarray(x6_ref),
                               rtol=1e-5, atol=1e-5)
    np.testing.assert_allclose(np.asarray(trans_delta),
                               np.asarray(trans[:, 1:] - trans[:, :-1]),
                               rtol=1e-6, atol=1e-6)

    # multi-grid-step Pallas check (N = 3200 -> 4 grid steps of 1024 rotvecs)
    rv_big = jax.random.normal(jax.random.PRNGKey(1), (1, 4, 800, 3),
                               dtype=jnp.float32)
    rm_big = rotvec_to_rotmat(rv_big)
    jax.block_until_ready(rm_big)
    np.testing.assert_allclose(np.asarray(rm_big),
                               np.asarray(_rotvec_to_rotmat_ref(rv_big)),
                               rtol=1e-5, atol=1e-5)

    # small-N fallback path (N = 112 < threshold -> pure-jnp Rodrigues)
    x_small = jax.random.normal(jax.random.PRNGKey(2), (2, 8, 24),
                                dtype=jnp.float32)
    out_small = model(x_small)
    jax.block_until_ready(out_small[:5])
    assert out_small[2].shape == (2, 8, 7, 3, 3)

    # mask_trans variant
    model_masked = SimplePreparator(mask_trans=True, pred_trans=False)
    out_masked = model_masked(x)
    jax.block_until_ready(out_masked[:5])
    assert not np.any(np.asarray(out_masked[3]))
    assert not np.any(np.asarray(out_masked[4]))

    print("KERNEL_OK")
</pallas_src>

<mosaic_0001>
module attributes {stable_mosaic.version = 11 : i64} {
  func.func @_rotvec_to_rotmat_kernel(%arg0: i32, %arg1: memref<3x8x128xf32, #tpu.memory_space<vmem>>, %arg2: memref<9x8x128xf32, #tpu.memory_space<vmem>>) attributes {dimension_semantics = [#tpu.dimension_semantics<parallel>], iteration_bounds = array<i64: 1>, scalar_prefetch = 0 : i64, scratch_operands = 0 : i64, tpu.core_type = #tpu.core_type<tc>, window_params = [{transform_indices = @transform_0, window_bounds = array<i64: 3, 8, 128>}, {transform_indices = @transform_1, window_bounds = array<i64: 9, 8, 128>}]} {
    %c0 = arith.constant 0 : index
    %c0_0 = arith.constant 0 : index
    %c0_1 = arith.constant 0 : index
    %0 = vector.load %arg1[%c0, %c0_0, %c0_1] : memref<3x8x128xf32, #tpu.memory_space<vmem>>, vector<1x8x128xf32>
    %1 = vector.shape_cast %0 : vector<1x8x128xf32> to vector<8x128xf32>
    %c1 = arith.constant 1 : index
    %c0_2 = arith.constant 0 : index
    %c0_3 = arith.constant 0 : index
    %2 = vector.load %arg1[%c1, %c0_2, %c0_3] : memref<3x8x128xf32, #tpu.memory_space<vmem>>, vector<1x8x128xf32>
    %3 = vector.shape_cast %2 : vector<1x8x128xf32> to vector<8x128xf32>
    %c2 = arith.constant 2 : index
    %c0_4 = arith.constant 0 : index
    %c0_5 = arith.constant 0 : index
    %4 = vector.load %arg1[%c2, %c0_4, %c0_5] : memref<3x8x128xf32, #tpu.memory_space<vmem>>, vector<1x8x128xf32>
    %5 = vector.shape_cast %4 : vector<1x8x128xf32> to vector<8x128xf32>
    %6 = arith.mulf %1, %1 : vector<8x128xf32>
    %7 = arith.mulf %3, %3 : vector<8x128xf32>
    %8 = arith.mulf %5, %5 : vector<8x128xf32>
    %9 = arith.addf %6, %7 : vector<8x128xf32>
    %10 = arith.addf %9, %8 : vector<8x128xf32>
    %cst = arith.constant 9.99999993E-9 : f32
    %11 = vector.broadcast %cst : f32 to vector<8x128xf32>
    %12 = arith.cmpf olt, %10, %11 : vector<8x128xf32>
    %cst_6 = arith.constant 1.000000e+00 : f32
    %13 = vector.broadcast %cst_6 : f32 to vector<8x128xf32>
    %14 = arith.select %12, %13, %10 : vector<8x128xi1>, vector<8x128xf32>
    %15 = math.rsqrt %14 : vector<8x128xf32>
    %16 = arith.mulf %14, %15 : vector<8x128xf32>
    %cst_7 = arith.constant 5.000000e-01 : f32
    %17 = vector.broadcast %cst_7 : f32 to vector<8x128xf32>
    %18 = arith.mulf %17, %16 : vector<8x128xf32>
    %19 = math.sin %18 : vector<8x128xf32>
    %20 = math.cos %18 : vector<8x128xf32>
    %cst_8 = arith.constant 2.000000e+00 : f32
    %21 = vector.broadcast %cst_8 : f32 to vector<8x128xf32>
    %22 = arith.mulf %21, %15 : vector<8x128xf32>
    %23 = arith.mulf %22, %19 : vector<8x128xf32>
    %cst_9 = arith.constant 0.166666672 : f32
    %24 = vector.broadcast %cst_9 : f32 to vector<8x128xf32>
    %25 = arith.mulf %10, %24 : vector<8x128xf32>
    %cst_10 = arith.constant 1.000000e+00 : f32
    %26 = vector.broadcast %cst_10 : f32 to vector<8x128xf32>
    %27 = arith.subf %26, %25 : vector<8x128xf32>
    %28 = arith.mulf %23, %20 : vector<8x128xf32>
    %29 = arith.select %12, %27, %28 : vector<8x128xi1>, vector<8x128xf32>
    %cst_11 = arith.constant 0.0416666679 : f32
    %30 = vector.broadcast %cst_11 : f32 to vector<8x128xf32>
    %31 = arith.mulf %10, %30 : vector<8x128xf32>
    %cst_12 = arith.constant 5.000000e-01 : f32
    %32 = vector.broadcast %cst_12 : f32 to vector<8x128xf32>
    %33 = arith.subf %32, %31 : vector<8x128xf32>
    %34 = arith.mulf %23, %23 : vector<8x128xf32>
    %cst_13 = arith.constant 5.000000e-01 : f32
    %35 = vector.broadcast %cst_13 : f32 to vector<8x128xf32>
    %36 = arith.mulf %35, %34 : vector<8x128xf32>
    %37 = arith.select %12, %33, %36 : vector<8x128xi1>, vector<8x128xf32>
    %38 = arith.mulf %1, %3 : vector<8x128xf32>
    %39 = arith.mulf %1, %5 : vector<8x128xf32>
    %40 = arith.mulf %3, %5 : vector<8x128xf32>
    %41 = arith.mulf %29, %1 : vector<8x128xf32>
    %42 = arith.mulf %29, %3 : vector<8x128xf32>
    %43 = arith.mulf %29, %5 : vector<8x128xf32>
    %44 = arith.addf %7, %8 : vector<8x128xf32>
    %45 = arith.mulf %37, %44 : vector<8x128xf32>
    %cst_14 = arith.constant 1.000000e+00 : f32
    %46 = vector.broadcast %cst_14 : f32 to vector<8x128xf32>
    %47 = arith.subf %46, %45 : vector<8x128xf32>
    %c0_15 = arith.constant 0 : index
    %c0_16 = arith.constant 0 : index
    %c0_17 = arith.constant 0 : index
    %48 = vector.load %arg2[%c0_15, %c0_16, %c0_17] : memref<9x8x128xf32, #tpu.memory_space<vmem>>, vector<1x8x128xf32>
    %49 = vector.shape_cast %48 : vector<1x8x128xf32> to vector<8x128xf32>
    %50 = vector.shape_cast %47 : vector<8x128xf32> to vector<1x8x128xf32>
    tpu.vector_store %arg2[%c0_15, %c0_16, %c0_17], %50 {strides = array<i32>} : memref<9x8x128xf32, #tpu.memory_space<vmem>>, vector<1x8x128xf32>,
    %51 = arith.mulf %37, %38 : vector<8x128xf32>
    %52 = arith.subf %51, %43 : vector<8x128xf32>
    %c1_18 = arith.constant 1 : index
    %c0_19 = arith.constant 0 : index
    %c0_20 = arith.constant 0 : index
    %53 = vector.load %arg2[%c1_18, %c0_19, %c0_20] : memref<9x8x128xf32, #tpu.memory_space<vmem>>, vector<1x8x128xf32>
    %54 = vector.shape_cast %53 : vector<1x8x128xf32> to vector<8x128xf32>
    %55 = vector.shape_cast %52 : vector<8x128xf32> to vector<1x8x128xf32>
    tpu.vector_store %arg2[%c1_18, %c0_19, %c0_20], %55 {strides = array<i32>} : memref<9x8x128xf32, #tpu.memory_space<vmem>>, vector<1x8x128xf32>,
    %56 = arith.mulf %37, %39 : vector<8x128xf32>
    %57 = arith.addf %56, %42 : vector<8x128xf32>
    %c2_21 = arith.constant 2 : index
    %c0_22 = arith.constant 0 : index
    %c0_23 = arith.constant 0 : index
    %58 = vector.load %arg2[%c2_21, %c0_22, %c0_23] : memref<9x8x128xf32, #tpu.memory_space<vmem>>, vector<1x8x128xf32>
    %59 = vector.shape_cast %58 : vector<1x8x128xf32> to vector<8x128xf32>
    %60 = vector.shape_cast %57 : vector<8x128xf32> to vector<1x8x128xf32>
    tpu.vector_store %arg2[%c2_21, %c0_22, %c0_23], %60 {strides = array<i32>} : memref<9x8x128xf32, #tpu.memory_space<vmem>>, vector<1x8x128xf32>,
    %61 = arith.mulf %37, %38 : vector<8x128xf32>
    %62 = arith.addf %61, %43 : vector<8x128xf32>
    %c3 = arith.constant 3 : index
    %c0_24 = arith.constant 0 : index
    %c0_25 = arith.constant 0 : index
    %63 = vector.load %arg2[%c3, %c0_24, %c0_25] : memref<9x8x128xf32, #tpu.memory_space<vmem>>, vector<1x8x128xf32>
    %64 = vector.shape_cast %63 : vector<1x8x128xf32> to vector<8x128xf32>
    %65 = vector.shape_cast %62 : vector<8x128xf32> to vector<1x8x128xf32>
    tpu.vector_store %arg2[%c3, %c0_24, %c0_25], %65 {strides = array<i32>} : memref<9x8x128xf32, #tpu.memory_space<vmem>>, vector<1x8x128xf32>,
    %66 = arith.addf %6, %8 : vector<8x128xf32>
    %67 = arith.mulf %37, %66 : vector<8x128xf32>
    %cst_26 = arith.constant 1.000000e+00 : f32
    %68 = vector.broadcast %cst_26 : f32 to vector<8x128xf32>
    %69 = arith.subf %68, %67 : vector<8x128xf32>
    %c4 = arith.constant 4 : index
    %c0_27 = arith.constant 0 : index
    %c0_28 = arith.constant 0 : index
    %70 = vector.load %arg2[%c4, %c0_27, %c0_28] : memref<9x8x128xf32, #tpu.memory_space<vmem>>, vector<1x8x128xf32>
    %71 = vector.shape_cast %70 : vector<1x8x128xf32> to vector<8x128xf32>
    %72 = vector.shape_cast %69 : vector<8x128xf32> to vector<1x8x128xf32>
    tpu.vector_store %arg2[%c4, %c0_27, %c0_28], %72 {strides = array<i32>} : memref<9x8x128xf32, #tpu.memory_space<vmem>>, vector<1x8x128xf32>,
    %73 = arith.mulf %37, %40 : vector<8x128xf32>
    %74 = arith.subf %73, %41 : vector<8x128xf32>
    %c5 = arith.constant 5 : index
    %c0_29 = arith.constant 0 : index
    %c0_30 = arith.constant 0 : index
    %75 = vector.load %arg2[%c5, %c0_29, %c0_30] : memref<9x8x128xf32, #tpu.memory_space<vmem>>, vector<1x8x128xf32>
    %76 = vector.shape_cast %75 : vector<1x8x128xf32> to vector<8x128xf32>
    %77 = vector.shape_cast %74 : vector<8x128xf32> to vector<1x8x128xf32>
    tpu.vector_store %arg2[%c5, %c0_29, %c0_30], %77 {strides = array<i32>} : memref<9x8x128xf32, #tpu.memory_space<vmem>>, vector<1x8x128xf32>,
    %78 = arith.mulf %37, %39 : vector<8x128xf32>
    %79 = arith.subf %78, %42 : vector<8x128xf32>
    %c6 = arith.constant 6 : index
    %c0_31 = arith.constant 0 : index
    %c0_32 = arith.constant 0 : index
    %80 = vector.load %arg2[%c6, %c0_31, %c0_32] : memref<9x8x128xf32, #tpu.memory_space<vmem>>, vector<1x8x128xf32>
    %81 = vector.shape_cast %80 : vector<1x8x128xf32> to vector<8x128xf32>
    %82 = vector.shape_cast %79 : vector<8x128xf32> to vector<1x8x128xf32>
    tpu.vector_store %arg2[%c6, %c0_31, %c0_32], %82 {strides = array<i32>} : memref<9x8x128xf32, #tpu.memory_space<vmem>>, vector<1x8x128xf32>,
    %83 = arith.mulf %37, %40 : vector<8x128xf32>
    %84 = arith.addf %83, %41 : vector<8x128xf32>
    %c7 = arith.constant 7 : index
    %c0_33 = arith.constant 0 : index
    %c0_34 = arith.constant 0 : index
    %85 = vector.load %arg2[%c7, %c0_33, %c0_34] : memref<9x8x128xf32, #tpu.memory_space<vmem>>, vector<1x8x128xf32>
    %86 = vector.shape_cast %85 : vector<1x8x128xf32> to vector<8x128xf32>
    %87 = vector.shape_cast %84 : vector<8x128xf32> to vector<1x8x128xf32>
    tpu.vector_store %arg2[%c7, %c0_33, %c0_34], %87 {strides = array<i32>} : memref<9x8x128xf32, #tpu.memory_space<vmem>>, vector<1x8x128xf32>,
    %88 = arith.addf %6, %7 : vector<8x128xf32>
    %89 = arith.mulf %37, %88 : vector<8x128xf32>
    %cst_35 = arith.constant 1.000000e+00 : f32
    %90 = vector.broadcast %cst_35 : f32 to vector<8x128xf32>
    %91 = arith.subf %90, %89 : vector<8x128xf32>
    %c8 = arith.constant 8 : index
    %c0_36 = arith.constant 0 : index
    %c0_37 = arith.constant 0 : index
    %92 = vector.load %arg2[%c8, %c0_36, %c0_37] : memref<9x8x128xf32, #tpu.memory_space<vmem>>, vector<1x8x128xf32>
    %93 = vector.shape_cast %92 : vector<1x8x128xf32> to vector<8x128xf32>
    %94 = vector.shape_cast %91 : vector<8x128xf32> to vector<1x8x128xf32>
    tpu.vector_store %arg2[%c8, %c0_36, %c0_37], %94 {strides = array<i32>} : memref<9x8x128xf32, #tpu.memory_space<vmem>>, vector<1x8x128xf32>,
    return
  }
  func.func @transform_0(%arg0: i32) -> (i32, i32, i32) {
    %c0_i32 = arith.constant 0 : i32
    %c0_i32_0 = arith.constant 0 : i32
    %c0_i32_1 = arith.constant 0 : i32
    return %c0_i32, %arg0, %c0_i32_0 : i32, i32, i32
  }
  func.func @transform_1(%arg0: i32) -> (i32, i32, i32) {
    %c0_i32 = arith.constant 0 : i32
    %c0_i32_0 = arith.constant 0 : i32
    %c0_i32_1 = arith.constant 0 : i32
    return %c0_i32, %arg0, %c0_i32_0 : i32, i32, i32
  }
}

</mosaic_0001>

<llo_original>
// kernel: tpu_custom_call.1
$region0: #{tpu_custom_call.1}
  #allocation0 [shape = 'u32[]', space=smem, size = 0x4, offset = 0x4, fixed_abs, tag = 'smem constant byte address 0x4 - core index']
  #allocation1 [shape = 'u32[144,128]{1,0:T(1,128)}', space=vmem, size = 0x12000, scoped, tag = 'internal scratch']
  %s0 = inlined_call_operand.hbm [shape: f32[3,8,128], index: 0, kind: input, shape index: {}]
  %s1 = inlined_call_operand.hbm [shape: f32[9,8,128], index: 1, kind: output, shape index: {}]
  %s2 = sld [smem:[#allocation0]]
  $region18: #{tpu_custom_call.1} parent=0
    _
  %s4 = ssub.s32 1, %s2
  %s5 = scalar_select 0, %s4, %s2
  $region1: #{tpu_custom_call.1} parent=0
    #allocation2 [shape = 'u8[12288]{0}', space=vmem, size = 0x3000, scoped, tag = 'input window, operand 0, single buffered']
    #allocation3 [shape = 's32[1]{0}', space=sflag, size = 0x4, scoped, tag = 'scoped memory for tpu_custom_call.1']
    #allocation4 [shape = 's32[1]{0}', space=sflag, size = 0x4, scoped, tag = 'scoped memory for tpu_custom_call.1']
    #allocation5 [shape = 'u8[36864]{0}', space=vmem, size = 0x9000, scoped, tag = 'output window, operand 0, single buffered']
    %6 = vsyncpa [#allocation3], 0
    %7 = vsyncpa [#allocation4], 0
    // Predicated region
    $region2: #{tpu_custom_call.1} parent=1 // pred_check
      _
    $region3: #{tpu_custom_call.1} parent=1 // pred_check_branch
      %9 = sbr.rel (0) target = $region5
    $region4: #{tpu_custom_call.1} parent=1 // pred_region
      %s11 = ssub.s32 384, 384
      %12 = vsyncadd [#allocation3], %s11
      %s13 = sshll.u32 [#allocation2], 4
      %s14 = int_to_ptr.vmem [resolvable:$true] %s13
      %19 = dma.hbm_to_vmem [thread:$0]  %s0, 384, %s14, [#allocation3], 128, 128, 8
    $region5: #{tpu_custom_call.1} parent=1 // pred_fallthru
      _
    // Predicated region
    $region6: #{tpu_custom_call.1} parent=1 // pred_check
      _
    $region7: #{tpu_custom_call.1} parent=1 // pred_check_branch
      %21 = sbr.rel (0) target = $region9
    $region8: #{tpu_custom_call.1} parent=1 // pred_region
      %22 = dma.done [#allocation3], 384
    $region9: #{tpu_custom_call.1} parent=1 // pred_fallthru
      _
    %v23 = vld [vmem:[#allocation2] sm:$0xff]
    %s24 = scalar_lea.vmem [#allocation2], 8
    %v25 = vld [vmem:[%s24] sm:$0xff]
    %s26 = scalar_lea.vmem [#allocation2], 16
    %v27 = vld [vmem:[%s26] sm:$0xff]
    %v28 = vmul.f32 %v23, %v23
    %v29 = vmul.f32 %v25, %v25
    %v30 = vmul.f32 %v27, %v27
    %v31 = vadd.f32 %v28, %v29
    %v32 = vadd.f32 %v31, %v30
    %vm33 = vcmp.lt.f32.partialorder %v32, 1e-08
    %v34 = vsel %vm33, 1.0, %v32
    %v35 = vrsqrt.pop %v34
    %v36 = vmul.f32 %v34, %v35
    %v37 = vmul.f32 %v36, 0.5
    %v38 = vand.u32 2147483647, %v37
    %vm39 = vcmp.le.f32.partialorder %v38, 0.7853982
    %vm40 = vcmp.lt.s32.totalorder %v37, 0
    %v41 = vand.u32 %v37, 2139095040
    %v42 = vshrl.u32 %v41, 23
    %v43 = vsub.s32 %v42, 127
    %v44 = vand.u32 2147483647, %v37
    %v45 = vand.u32 %v44, 8388607
    %v46 = vor.u32 %v45, 8388608
    %v47 = vsub.s32 0, %v46
    %v48 = vadd.s32 %v43, 1
    %vm49 = vcmp.gt.s32.totalorder %v48, 0
    %v50 = vsel %vm49, %v48, 0
    %v51 = vshrl.u32 %v50, 5
    %v52 = vand.u32 %v50, 31
    %v53 = vsub.s32 32, %v52
    %v54 = vshrl.u32 683565275, %v53
    %v55 = vshll.u32 683565275, %v52
    %v56 = vshrl.u32 2475754826, %v53
    %v57 = vor.u32 %v55, %v56
    %v58 = vshll.u32 2475754826, %v52
    %v59 = vshrl.u32 2131351028, %v53
    %v60 = vor.u32 %v58, %v59
    %v61 = vshll.u32 2131351028, %v52
    %v62 = vshrl.u32 2102212464, %v53
    %v63 = vor.u32 %v61, %v62
    %v64 = vshll.u32 2102212464, %v52
    %v65 = vshrl.u32 920167782, %v53
    %v66 = vor.u32 %v64, %v65
    %v67 = vshll.u32 920167782, %v52
    %v68 = vshrl.u32 1326507024, %v53
    %v69 = vor.u32 %v67, %v68
    %vm70 = vcmp.lt.s32.totalorder %v51, 1
    %vm71 = vcmp.lt.s32.totalorder %v51, 2
    %vm72 = vcmp.lt.s32.totalorder %v51, 3
    %vm73 = vcmp.lt.s32.totalorder %v51, 4
    %v74 = vsel %vm70, %v54, %v57
    %v75 = vsel %vm73, %v63, 2102212464
    %v76 = vsel %vm72, %v60, %v75
    %v77 = vsel %vm71, %v74, %v76
    %v78 = vsel %vm70, %v57, %v60
    %v79 = vsel %vm73, %v66, 920167782
    %v80 = vsel %vm72, %v63, %v79
    %v81 = vsel %vm71, %v78, %v80
    %v82 = vsel %vm70, %v60, %v63
    %v83 = vsel %vm73, %v69, 1326507024
    %v84 = vsel %vm72, %v66, %v83
    %v85 = vsel %vm71, %v82, %v84
    %v86 = vshll.u32 %v46, 8
    %v87 = vmul.u32.u64.compose %v86, %v85
    %v88 = vextract.low.u32 %v87
    %v89 = vextract.high.u32 %v87
    %v90 = vmul.u32.u64.compose %v86, %v81
    %v91 = vextract.low.u32 %v90
    %v92 = vextract.high.u32 %v90
    %v93 = vmul.u32 %v86, %v77
    %v94 = vadd.s32 %v89, %v91
    %vm95 = vc.u32 %v89, %v91
    %v96 = vadd.s32 %v92, 1
    %v97 = vsel %vm95, %v96, %v92
    %v98 = vadd.s32 %v93, %v97
    %v99 = vadd.s32 %v98, 536870912
    %v100 = vshrl.u32 %v99, 30
    %v101 = vshll.u32 %v100, 30
    %v102 = vsub.s32 %v98, %v101
    %vm103 = vcmp.lt.s32.totalorder %v102, 0
    %v104 = vsub.s32 0, %v102
    %v105 = vsel %vm103, %v104, %v102
    %v106 = vclz %v105
    %v107 = vsub.s32 %v106, 2
    %vm108 = vcmp.gt.s32.totalorder 0, %v107
    %v109 = vsel %vm108, 0, %v107
    %v110 = vsub.s32 32, %v109
    %v111 = vshll.u32 %v102, %v109
    %v112 = vshrl.u32 %v94, %v110
    %v113 = vor.u32 %v111, %v112
    %v114 = vsub.s32 4294967266, %v109
    %v115 = vadd.s32 %v114, 127
    %v116 = vshll.u32 %v115, 23
    %v117 = vor.u32 4788187, %v116
    %v118 = vand.u32 2147483647, %v117
    %v120 = vcvt.s32.f32 %v113
    %v121 = vmul.f32 %v120, %v118
    %v122 = vxor.u32 %v121, 2147483648
    %v123 = vsel %vm40, %v122, %v121
    %v124 = vsub.s32 4, %v100
    %v125 = vsel %vm40, %v124, %v100
    %v126 = vsel %vm39, %v37, %v123
    %v127 = vsel %vm39, 0, %v125
    %v128 = vcosq.f32.pop %v126
    %v129 = vsinq.f32.pop %v126
    %vm130 = vweird.f32 %v37
    %v131 = vadd.s32 %v127, 3
    %v132 = vand.u32 %v131, 3
    %vm133 = vcmp.lt.s32.totalorder %v132, 2
    %vm134 = vcmp.eq.s32.totalorder %v132, 0
    %v135 = vxor.u32 %v129, 2147483648
    %v136 = vsel %vm134, %v128, %v135
    %vm137 = vcmp.eq.s32.totalorder %v132, 2
    %v138 = vxor.u32 %v128, 2147483648
    %v139 = vsel %vm137, %v138, %v129
    %v140 = vsel %vm133, %v136, %v139
    %v141 = vsel %vm130, nan, %v140
    %v142 = vand.u32 2147483647, %v37
    %vm143 = vcmp.le.f32.partialorder %v142, 0.7853982
    %vm144 = vcmp.lt.s32.totalorder %v37, 0
    %v145 = vand.u32 %v37, 2139095040
    %v146 = vshrl.u32 %v145, 23
    %v147 = vsub.s32 %v146, 127
    %v148 = vand.u32 2147483647, %v37
    %v149 = vand.u32 %v148, 8388607
    %v150 = vor.u32 %v149, 8388608
    %v151 = vsub.s32 0, %v150
    %v152 = vadd.s32 %v147, 1
    %vm153 = vcmp.gt.s32.totalorder %v152, 0
    %v154 = vsel %vm153, %v152, 0
    %v155 = vshrl.u32 %v154, 5
    %v156 = vand.u32 %v154, 31
    %v157 = vsub.s32 32, %v156
    %v158 = vshrl.u32 683565275, %v157
    %v159 = vshll.u32 683565275, %v156
    %v160 = vshrl.u32 2475754826, %v157
    %v161 = vor.u32 %v159, %v160
    %v162 = vshll.u32 2475754826, %v156
    %v163 = vshrl.u32 2131351028, %v157
    %v164 = vor.u32 %v162, %v163
    %v165 = vshll.u32 2131351028, %v156
    %v166 = vshrl.u32 2102212464, %v157
    %v167 = vor.u32 %v165, %v166
    %v168 = vshll.u32 2102212464, %v156
    %v169 = vshrl.u32 920167782, %v157
    %v170 = vor.u32 %v168, %v169
    %v171 = vshll.u32 920167782, %v156
    %v172 = vshrl.u32 1326507024, %v157
    %v173 = vor.u32 %v171, %v172
    %vm174 = vcmp.lt.s32.totalorder %v155, 1
    %vm175 = vcmp.lt.s32.totalorder %v155, 2
    %vm176 = vcmp.lt.s32.totalorder %v155, 3
    %vm177 = vcmp.lt.s32.totalorder %v155, 4
    %v178 = vsel %vm174, %v158, %v161
    %v179 = vsel %vm177, %v167, 2102212464
    %v180 = vsel %vm176, %v164, %v179
    %v181 = vsel %vm175, %v178, %v180
    %v182 = vsel %vm174, %v161, %v164
    %v183 = vsel %vm177, %v170, 920167782
    %v184 = vsel %vm176, %v167, %v183
    %v185 = vsel %vm175, %v182, %v184
    %v186 = vsel %vm174, %v164, %v167
    %v187 = vsel %vm177, %v173, 1326507024
    %v188 = vsel %vm176, %v170, %v187
    %v189 = vsel %vm175, %v186, %v188
    %v190 = vshll.u32 %v150, 8
    %v191 = vmul.u32.u64.compose %v190, %v189
    %v192 = vextract.low.u32 %v191
    %v193 = vextract.high.u32 %v191
    %v194 = vmul.u32.u64.compose %v190, %v185
    %v195 = vextract.low.u32 %v194
    %v196 = vextract.high.u32 %v194
    %v197 = vmul.u32 %v190, %v181
    %v198 = vadd.s32 %v193, %v195
    %vm199 = vc.u32 %v193, %v195
    %v200 = vadd.s32 %v196, 1
    %v201 = vsel %vm199, %v200, %v196
    %v202 = vadd.s32 %v197, %v201
    %v203 = vadd.s32 %v202, 536870912
    %v204 = vshrl.u32 %v203, 30
    %v205 = vshll.u32 %v204, 30
    %v206 = vsub.s32 %v202, %v205
    %vm207 = vcmp.lt.s32.totalorder %v206, 0
    %v208 = vsub.s32 0, %v206
    %v209 = vsel %vm207, %v208, %v206
    %v210 = vclz %v209
    %v211 = vsub.s32 %v210, 2
    %vm212 = vcmp.gt.s32.totalorder 0, %v211
    %v213 = vsel %vm212, 0, %v211
    %v214 = vsub.s32 32, %v213
    %v215 = vshll.u32 %v206, %v213
    %v216 = vshrl.u32 %v198, %v214
    %v217 = vor.u32 %v215, %v216
    %v218 = vsub.s32 4294967266, %v213
    %v219 = vadd.s32 %v218, 127
    %v220 = vshll.u32 %v219, 23
    %v221 = vor.u32 4788187, %v220
    %v222 = vand.u32 2147483647, %v221
    %v224 = vcvt.s32.f32 %v217
    %v225 = vmul.f32 %v224, %v222
    %v226 = vxor.u32 %v225, 2147483648
    %v227 = vsel %vm144, %v226, %v225
    %v228 = vsub.s32 4, %v204
    %v229 = vsel %vm144, %v228, %v204
    %v230 = vsel %vm143, %v37, %v227
    %v231 = vsel %vm143, 0, %v229
    %v232 = vcosq.f32.pop %v230
    %v233 = vsinq.f32.pop %v230
    %vm234 = vweird.f32 %v37
    %v235 = vand.u32 %v231, 3
    %vm236 = vcmp.lt.s32.totalorder %v235, 2
    %vm237 = vcmp.eq.s32.totalorder %v235, 0
    %v238 = vxor.u32 %v233, 2147483648
    %v239 = vsel %vm237, %v232, %v238
    %vm240 = vcmp.eq.s32.totalorder %v235, 2
    %v241 = vxor.u32 %v232, 2147483648
    %v242 = vsel %vm240, %v241, %v233
    %v243 = vsel %vm236, %v239, %v242
    %v244 = vsel %vm234, nan, %v243
    %v245 = vmul.f32 %v35, 2.0
    %v246 = vmul.f32 %v245, %v141
    %v247 = vmul.f32 %v32, 0.16666667
    %v248 = vsub.f32 1.0, %v247
    %v249 = vmul.f32 %v246, %v244
    %v250 = vsel %vm33, %v248, %v249
    %v251 = vmul.f32 %v32, 0.041666668
    %v252 = vsub.f32 0.5, %v251
    %v253 = vmul.f32 %v246, %v246
    %v254 = vmul.f32 %v253, 0.5
    %v255 = vsel %vm33, %v252, %v254
    %v256 = vmul.f32 %v23, %v25
    %v257 = vmul.f32 %v23, %v27
    %v258 = vmul.f32 %v25, %v27
    %v259 = vmul.f32 %v250, %v23
    %v260 = vmul.f32 %v250, %v25
    %v261 = vmul.f32 %v250, %v27
    %v262 = vadd.f32 %v29, %v30
    %v263 = vmul.f32 %v255, %v262
    %v264 = vsub.f32 1.0, %v263
    %265 = vst [vmem:[#allocation5] sm:$0xff] %v264
    %v266 = vmul.f32 %v255, %v256
    %v267 = vsub.f32 %v266, %v261
    %s268 = scalar_lea.vmem [#allocation5], 8
    %269 = vst [vmem:[%s268] sm:$0xff] %v267
    %v270 = vmul.f32 %v255, %v257
    %v271 = vadd.f32 %v270, %v260
    %s272 = scalar_lea.vmem [#allocation5], 16
    %273 = vst [vmem:[%s272] sm:$0xff] %v271
    %v274 = vadd.f32 %v266, %v261
    %s275 = scalar_lea.vmem [#allocation5], 24
    %276 = vst [vmem:[%s275] sm:$0xff] %v274
    %v277 = vadd.f32 %v28, %v30
    %v278 = vmul.f32 %v255, %v277
    %v279 = vsub.f32 1.0, %v278
    %s280 = scalar_lea.vmem [#allocation5], 32
    %281 = vst [vmem:[%s280] sm:$0xff] %v279
    %v282 = vmul.f32 %v255, %v258
    %v283 = vsub.f32 %v282, %v259
    %s284 = scalar_lea.vmem [#allocation5], 40
    %285 = vst [vmem:[%s284] sm:$0xff] %v283
    %v286 = vsub.f32 %v270, %v260
    %s287 = scalar_lea.vmem [#allocation5], 48
    %288 = vst [vmem:[%s287] sm:$0xff] %v286
    %v289 = vadd.f32 %v282, %v259
    %s290 = scalar_lea.vmem [#allocation5], 56
    %291 = vst [vmem:[%s290] sm:$0xff] %v289
    %v292 = vmul.f32 %v255, %v31
    %v293 = vsub.f32 1.0, %v292
    %s294 = scalar_lea.vmem [#allocation5], 64
    %295 = vst [vmem:[%s294] sm:$0xff] %v293
    // Predicated region
    $region10: #{tpu_custom_call.1} parent=1 // pred_check
      _
    $region11: #{tpu_custom_call.1} parent=1 // pred_check_branch
      %297 = sbr.rel (0) target = $region13
    $region12: #{tpu_custom_call.1} parent=1 // pred_region
      %s299 = ssub.s32 1152, 1152
      %300 = vsyncadd [#allocation4], %s299
      %s301 = sshll.u32 [#allocation5], 4
      %s302 = int_to_ptr.vmem [resolvable:$true] %s301
      %307 = dma.vmem_to_hbm [thread:$0]  %s302, 1152, %s1, [#allocation4], 128, 128, 8
    $region13: #{tpu_custom_call.1} parent=1 // pred_fallthru
      _
    // Predicated region
    $region14: #{tpu_custom_call.1} parent=1 // pred_check
      _
    $region15: #{tpu_custom_call.1} parent=1 // pred_check_branch
      %309 = sbr.rel (0) target = $region17
    $region16: #{tpu_custom_call.1} parent=1 // pred_region
      %310 = dma.done [#allocation4], 1152
    $region17: #{tpu_custom_call.1} parent=1 // pred_fallthru
      _
    %311 = vsyncpa [#allocation3], 1
    %312 = vsyncpa [#allocation4], 1

</llo_original>
